<compile_context>
chip_gen: v7x
topology: tpu7x:2x2x1
jax: 0.10.0
libtpu: 0.0.40
codegen_flags: <defaults>
</compile_context>

<pallas_src>
import functools

import jax
import jax.numpy as jnp
from jax import lax
from jax.experimental import pallas as pl
from jax.experimental.pallas import tpu as pltpu


def _cross_attn_kernel(x_ref, ctx_ref, wq_ref, wk_ref, wv_ref, wo_ref, bo_ref,
                       o_ref, *, heads, dim_head, scale):
    # x_ref:  (1, N, Dq)    ctx_ref: (1, M, Dc)
    # wq_ref: (Dq, inner)   wk_ref/wv_ref: (Dc, inner)
    # wo_ref: (inner, Dq)   bo_ref: (1, Dq)
    # o_ref:  (1, N, Dq)
    f32 = jnp.float32
    bf16 = jnp.bfloat16

    x = x_ref[0].astype(bf16)        # (N, Dq)
    ctx = ctx_ref[0].astype(bf16)    # (M, Dc)

    # All-heads projections: three full-width MXU matmuls (inner = heads*dim_head).
    q = jnp.dot(x, wq_ref[...].astype(bf16), preferred_element_type=f32)    # (N, inner)
    k = jnp.dot(ctx, wk_ref[...].astype(bf16), preferred_element_type=f32)  # (M, inner)
    v = jnp.dot(ctx, wv_ref[...].astype(bf16), preferred_element_type=f32)  # (M, inner)

    # Fold the attention scale into q (cheaper than scaling the (N, M) sim per head).
    q = (q * scale).astype(bf16)
    k = k.astype(bf16)
    v = v.astype(bf16)

    # Per-head attention (heads is a small compile-time constant -> static loop).
    outs = []
    for h in range(heads):
        sl = slice(h * dim_head, (h + 1) * dim_head)
        qh, kh, vh = q[:, sl], k[:, sl], v[:, sl]         # (N, dh), (M, dh), (M, dh)

        # (N, dh) x (M, dh) contracting dh -> (N, M); no explicit k transpose.
        sim = lax.dot_general(qh, kh, (((1,), (1,)), ((), ())),
                              preferred_element_type=f32)  # (N, M), f32

        m = jnp.max(sim, axis=-1, keepdims=True)
        p = jnp.exp(sim - m)
        denom = jnp.sum(p, axis=-1, keepdims=True)
        attn = (p * pl.reciprocal(denom, approx=True)).astype(bf16)

        outs.append(jnp.dot(attn, vh, preferred_element_type=f32))  # (N, dh)

    # Merge heads lane-dense: (N, inner), then fused to_out projection + bias.
    merged = jnp.concatenate(outs, axis=-1).astype(bf16)             # (N, inner)
    y = jnp.dot(merged, wo_ref[...].astype(bf16), preferred_element_type=f32)  # (N, Dq)
    o_ref[0] = (y + bo_ref[...]).astype(o_ref.dtype)

    # TODO(synk): attention `mask` argument of the PyTorch forward is unused in the
    # reference forward path and is not implemented here.


def cross_attention_pallas(x, context, wq, wk, wv, wo, bo, *, heads, dim_head):
    """Pallas implementation of CrossAttention.forward (eval mode, dropout=0).

    x:       (B, N, query_dim)
    context: (B, M, context_dim)
    wq: (query_dim, inner)  wk, wv: (context_dim, inner)   (inner = heads*dim_head)
    wo: (inner, query_dim)  bo: (query_dim,)
    """
    B, N, Dq = x.shape
    _, M, Dc = context.shape
    inner = heads * dim_head
    scale = dim_head ** (-0.5)

    kernel = functools.partial(
        _cross_attn_kernel, heads=heads, dim_head=dim_head, scale=scale)

    out = pl.pallas_call(
        kernel,
        out_shape=jax.ShapeDtypeStruct((B, N, Dq), x.dtype),
        grid=(B,),
        in_specs=[
            pl.BlockSpec((1, N, Dq), lambda b: (b, 0, 0)),      # x, per-batch tile
            pl.BlockSpec((1, M, Dc), lambda b: (b, 0, 0)),      # context, per-batch tile
            pl.BlockSpec((Dq, inner), lambda b: (0, 0)),        # wq (resident)
            pl.BlockSpec((Dc, inner), lambda b: (0, 0)),        # wk (resident)
            pl.BlockSpec((Dc, inner), lambda b: (0, 0)),        # wv (resident)
            pl.BlockSpec((inner, Dq), lambda b: (0, 0)),        # wo (resident)
            pl.BlockSpec((1, Dq), lambda b: (0, 0)),            # bias (resident)
        ],
        out_specs=pl.BlockSpec((1, N, Dq), lambda b: (b, 0, 0)),
        compiler_params=pltpu.CompilerParams(
            dimension_semantics=("parallel",)),
    )(x, context, wq, wk, wv, wo, bo.reshape(1, Dq))

    # Dropout(p=0.0) is identity (eval), so nothing more to do.
    return out


def cross_attention_ref(x, context, wq, wk, wv, wo, bo, *, heads, dim_head):
    """Pure-JAX f32 reference mirroring the PyTorch forward."""
    B, N, _ = x.shape
    M = context.shape[1]
    scale = dim_head ** (-0.5)
    q = x @ wq
    k = context @ wk
    v = context @ wv

    def split(t, L):
        return t.reshape(B, L, heads, dim_head).transpose(0, 2, 1, 3)

    qh, kh, vh = split(q, N), split(k, M), split(v, M)
    sim = jnp.einsum('bhid,bhjd->bhij', qh, kh) * scale
    attn = jax.nn.softmax(sim, axis=-1)
    o = jnp.einsum('bhij,bhjd->bhid', attn, vh)
    o = o.transpose(0, 2, 1, 3).reshape(B, N, heads * dim_head)
    return o @ wo + bo


if __name__ == "__main__":
    # Small, module-consistent shapes.
    B, N, M = 2, 16, 8
    query_dim, context_dim = 32, 32
    heads, dim_head = 4, 16
    inner = heads * dim_head

    key = jax.random.PRNGKey(0)
    kx, kc, kq, kk, kv, ko, kb = jax.random.split(key, 7)

    x = jax.random.normal(kx, (B, N, query_dim), dtype=jnp.float32)
    context = jax.random.normal(kc, (B, M, context_dim), dtype=jnp.float32)

    # Deterministic synthetic parameters (nn.Linear weights stored as (in, out)).
    wq = jax.random.normal(kq, (query_dim, inner), dtype=jnp.float32) * 0.05
    wk = jax.random.normal(kk, (context_dim, inner), dtype=jnp.float32) * 0.05
    wv = jax.random.normal(kv, (context_dim, inner), dtype=jnp.float32) * 0.05
    wo = jax.random.normal(ko, (inner, query_dim), dtype=jnp.float32) * 0.05
    bo = jax.random.normal(kb, (query_dim,), dtype=jnp.float32) * 0.05

    out = cross_attention_pallas(
        x, context, wq, wk, wv, wo, bo, heads=heads, dim_head=dim_head)
    out = jax.block_until_ready(out)

    ref = cross_attention_ref(
        x, context, wq, wk, wv, wo, bo, heads=heads, dim_head=dim_head)

    assert out.shape == (B, N, query_dim)
    # bf16 MXU inputs (f32 accumulation) -> loosen tolerance vs. the f32 reference.
    assert jnp.allclose(out, ref, atol=2e-2, rtol=2e-2), (
        float(jnp.max(jnp.abs(out - ref))))

    print("KERNEL_OK")
</pallas_src>

<mosaic_0001>
module attributes {stable_mosaic.version = 11 : i64} {
  func.func @_cross_attn_kernel(%arg0: i32, %arg1: memref<1x16x32xf32, #tpu.memory_space<vmem>>, %arg2: memref<1x8x32xf32, #tpu.memory_space<vmem>>, %arg3: memref<32x64xf32, #tpu.memory_space<vmem>>, %arg4: memref<32x64xf32, #tpu.memory_space<vmem>>, %arg5: memref<32x64xf32, #tpu.memory_space<vmem>>, %arg6: memref<64x32xf32, #tpu.memory_space<vmem>>, %arg7: memref<1x32xf32, #tpu.memory_space<vmem>>, %arg8: memref<1x16x32xf32, #tpu.memory_space<vmem>>) attributes {dimension_semantics = [#tpu.dimension_semantics<parallel>], iteration_bounds = array<i64: 2>, scalar_prefetch = 0 : i64, scratch_operands = 0 : i64, tpu.core_type = #tpu.core_type<tc>, window_params = [{transform_indices = @transform_0, window_bounds = array<i64: 1, 16, 32>}, {transform_indices = @transform_1, window_bounds = array<i64: 1, 8, 32>}, {pipeline_mode = #tpu.pipeline_mode<synchronous>, transform_indices = @transform_2, window_bounds = array<i64: 32, 64>}, {pipeline_mode = #tpu.pipeline_mode<synchronous>, transform_indices = @transform_3, window_bounds = array<i64: 32, 64>}, {pipeline_mode = #tpu.pipeline_mode<synchronous>, transform_indices = @transform_4, window_bounds = array<i64: 32, 64>}, {pipeline_mode = #tpu.pipeline_mode<synchronous>, transform_indices = @transform_5, window_bounds = array<i64: 64, 32>}, {pipeline_mode = #tpu.pipeline_mode<synchronous>, transform_indices = @transform_6, window_bounds = array<i64: 1, 32>}, {transform_indices = @transform_7, window_bounds = array<i64: 1, 16, 32>}]} {
    %c0 = arith.constant 0 : index
    %c0_0 = arith.constant 0 : index
    %c0_1 = arith.constant 0 : index
    %0 = vector.load %arg1[%c0, %c0_0, %c0_1] : memref<1x16x32xf32, #tpu.memory_space<vmem>>, vector<1x16x32xf32>
    %1 = vector.shape_cast %0 : vector<1x16x32xf32> to vector<16x32xf32>
    %2 = arith.truncf %1 : vector<16x32xf32> to vector<16x32xbf16>
    %c0_2 = arith.constant 0 : index
    %c0_3 = arith.constant 0 : index
    %c0_4 = arith.constant 0 : index
    %3 = vector.load %arg2[%c0_2, %c0_3, %c0_4] : memref<1x8x32xf32, #tpu.memory_space<vmem>>, vector<1x8x32xf32>
    %4 = vector.shape_cast %3 : vector<1x8x32xf32> to vector<8x32xf32>
    %5 = arith.truncf %4 : vector<8x32xf32> to vector<8x32xbf16>
    %c0_5 = arith.constant 0 : index
    %c0_6 = arith.constant 0 : index
    %6 = vector.load %arg3[%c0_5, %c0_6] : memref<32x64xf32, #tpu.memory_space<vmem>>, vector<32x64xf32>
    %7 = arith.truncf %6 : vector<32x64xf32> to vector<32x64xbf16>
    %cst = arith.constant dense<0.000000e+00> : vector<16x64xf32>
    %8 = tpu.matmul %2, %7, %cst {dimension_numbers = #tpu.dot_dimension_numbers<[1], [0], [0], [1], [0, 0, 1, 1], [], []>} : vector<16x32xbf16>, vector<32x64xbf16>, vector<16x64xf32> -> vector<16x64xf32>
    %c0_7 = arith.constant 0 : index
    %c0_8 = arith.constant 0 : index
    %9 = vector.load %arg4[%c0_7, %c0_8] : memref<32x64xf32, #tpu.memory_space<vmem>>, vector<32x64xf32>
    %10 = arith.truncf %9 : vector<32x64xf32> to vector<32x64xbf16>
    %cst_9 = arith.constant dense<0.000000e+00> : vector<8x64xf32>
    %11 = tpu.matmul %5, %10, %cst_9 {dimension_numbers = #tpu.dot_dimension_numbers<[1], [0], [0], [1], [0, 0, 1, 1], [], []>} : vector<8x32xbf16>, vector<32x64xbf16>, vector<8x64xf32> -> vector<8x64xf32>
    %c0_10 = arith.constant 0 : index
    %c0_11 = arith.constant 0 : index
    %12 = vector.load %arg5[%c0_10, %c0_11] : memref<32x64xf32, #tpu.memory_space<vmem>>, vector<32x64xf32>
    %13 = arith.truncf %12 : vector<32x64xf32> to vector<32x64xbf16>
    %cst_12 = arith.constant dense<0.000000e+00> : vector<8x64xf32>
    %14 = tpu.matmul %5, %13, %cst_12 {dimension_numbers = #tpu.dot_dimension_numbers<[1], [0], [0], [1], [0, 0, 1, 1], [], []>} : vector<8x32xbf16>, vector<32x64xbf16>, vector<8x64xf32> -> vector<8x64xf32>
    %cst_13 = arith.constant 2.500000e-01 : f32
    %15 = vector.broadcast %cst_13 : f32 to vector<16x64xf32>
    %16 = arith.mulf %8, %15 : vector<16x64xf32>
    %17 = arith.truncf %16 : vector<16x64xf32> to vector<16x64xbf16>
    %18 = arith.truncf %11 : vector<8x64xf32> to vector<8x64xbf16>
    %19 = arith.truncf %14 : vector<8x64xf32> to vector<8x64xbf16>
    %20 = vector.extract_strided_slice %17 {offsets = [0, 0], sizes = [16, 16], strides = [1, 1]} : vector<16x64xbf16> to vector<16x16xbf16>
    %21 = vector.extract_strided_slice %18 {offsets = [0, 0], sizes = [8, 16], strides = [1, 1]} : vector<8x64xbf16> to vector<8x16xbf16>
    %22 = vector.extract_strided_slice %19 {offsets = [0, 0], sizes = [8, 16], strides = [1, 1]} : vector<8x64xbf16> to vector<8x16xbf16>
    %cst_14 = arith.constant dense<0.000000e+00> : vector<16x8xf32>
    %23 = tpu.matmul %20, %21, %cst_14 {dimension_numbers = #tpu.dot_dimension_numbers<[1], [1], [0], [0], [0, 0, 1, 0], [], []>} : vector<16x16xbf16>, vector<8x16xbf16>, vector<16x8xf32> -> vector<16x8xf32>
    %cst_15 = arith.constant dense<0xFF800000> : vector<16xf32>
    %24 = vector.multi_reduction <maximumf>, %23, %cst_15 [1] : vector<16x8xf32> to vector<16xf32>
    %25 = vector.shape_cast %24 : vector<16xf32> to vector<16x1xf32>
    %26 = vector.broadcast %25 : vector<16x1xf32> to vector<16x8xf32>
    %27 = arith.subf %23, %26 : vector<16x8xf32>
    %28 = math.exp %27 : vector<16x8xf32>
    %cst_16 = arith.constant dense<0.000000e+00> : vector<16xf32>
    %29 = vector.multi_reduction <add>, %28, %cst_16 [1] : vector<16x8xf32> to vector<16xf32>
    %30 = vector.shape_cast %29 : vector<16xf32> to vector<16x1xf32>
    %31 = tpu.reciprocal %30 {approx = true} : vector<16x1xf32> -> vector<16x1xf32>
    %32 = vector.broadcast %31 : vector<16x1xf32> to vector<16x8xf32>
    %33 = arith.mulf %28, %32 : vector<16x8xf32>
    %34 = arith.truncf %33 : vector<16x8xf32> to vector<16x8xbf16>
    %cst_17 = arith.constant dense<0.000000e+00> : vector<16x16xf32>
    %35 = tpu.matmul %34, %22, %cst_17 {dimension_numbers = #tpu.dot_dimension_numbers<[1], [0], [0], [1], [0, 0, 1, 1], [], []>} : vector<16x8xbf16>, vector<8x16xbf16>, vector<16x16xf32> -> vector<16x16xf32>
    %36 = vector.extract_strided_slice %17 {offsets = [0, 16], sizes = [16, 16], strides = [1, 1]} : vector<16x64xbf16> to vector<16x16xbf16>
    %37 = vector.extract_strided_slice %18 {offsets = [0, 16], sizes = [8, 16], strides = [1, 1]} : vector<8x64xbf16> to vector<8x16xbf16>
    %38 = vector.extract_strided_slice %19 {offsets = [0, 16], sizes = [8, 16], strides = [1, 1]} : vector<8x64xbf16> to vector<8x16xbf16>
    %cst_18 = arith.constant dense<0.000000e+00> : vector<16x8xf32>
    %39 = tpu.matmul %36, %37, %cst_18 {dimension_numbers = #tpu.dot_dimension_numbers<[1], [1], [0], [0], [0, 0, 1, 0], [], []>} : vector<16x16xbf16>, vector<8x16xbf16>, vector<16x8xf32> -> vector<16x8xf32>
    %cst_19 = arith.constant dense<0xFF800000> : vector<16xf32>
    %40 = vector.multi_reduction <maximumf>, %39, %cst_19 [1] : vector<16x8xf32> to vector<16xf32>
    %41 = vector.shape_cast %40 : vector<16xf32> to vector<16x1xf32>
    %42 = vector.broadcast %41 : vector<16x1xf32> to vector<16x8xf32>
    %43 = arith.subf %39, %42 : vector<16x8xf32>
    %44 = math.exp %43 : vector<16x8xf32>
    %cst_20 = arith.constant dense<0.000000e+00> : vector<16xf32>
    %45 = vector.multi_reduction <add>, %44, %cst_20 [1] : vector<16x8xf32> to vector<16xf32>
    %46 = vector.shape_cast %45 : vector<16xf32> to vector<16x1xf32>
    %47 = tpu.reciprocal %46 {approx = true} : vector<16x1xf32> -> vector<16x1xf32>
    %48 = vector.broadcast %47 : vector<16x1xf32> to vector<16x8xf32>
    %49 = arith.mulf %44, %48 : vector<16x8xf32>
    %50 = arith.truncf %49 : vector<16x8xf32> to vector<16x8xbf16>
    %cst_21 = arith.constant dense<0.000000e+00> : vector<16x16xf32>
    %51 = tpu.matmul %50, %38, %cst_21 {dimension_numbers = #tpu.dot_dimension_numbers<[1], [0], [0], [1], [0, 0, 1, 1], [], []>} : vector<16x8xbf16>, vector<8x16xbf16>, vector<16x16xf32> -> vector<16x16xf32>
    %52 = vector.extract_strided_slice %17 {offsets = [0, 32], sizes = [16, 16], strides = [1, 1]} : vector<16x64xbf16> to vector<16x16xbf16>
    %53 = vector.extract_strided_slice %18 {offsets = [0, 32], sizes = [8, 16], strides = [1, 1]} : vector<8x64xbf16> to vector<8x16xbf16>
    %54 = vector.extract_strided_slice %19 {offsets = [0, 32], sizes = [8, 16], strides = [1, 1]} : vector<8x64xbf16> to vector<8x16xbf16>
    %cst_22 = arith.constant dense<0.000000e+00> : vector<16x8xf32>
    %55 = tpu.matmul %52, %53, %cst_22 {dimension_numbers = #tpu.dot_dimension_numbers<[1], [1], [0], [0], [0, 0, 1, 0], [], []>} : vector<16x16xbf16>, vector<8x16xbf16>, vector<16x8xf32> -> vector<16x8xf32>
    %cst_23 = arith.constant dense<0xFF800000> : vector<16xf32>
    %56 = vector.multi_reduction <maximumf>, %55, %cst_23 [1] : vector<16x8xf32> to vector<16xf32>
    %57 = vector.shape_cast %56 : vector<16xf32> to vector<16x1xf32>
    %58 = vector.broadcast %57 : vector<16x1xf32> to vector<16x8xf32>
    %59 = arith.subf %55, %58 : vector<16x8xf32>
    %60 = math.exp %59 : vector<16x8xf32>
    %cst_24 = arith.constant dense<0.000000e+00> : vector<16xf32>
    %61 = vector.multi_reduction <add>, %60, %cst_24 [1] : vector<16x8xf32> to vector<16xf32>
    %62 = vector.shape_cast %61 : vector<16xf32> to vector<16x1xf32>
    %63 = tpu.reciprocal %62 {approx = true} : vector<16x1xf32> -> vector<16x1xf32>
    %64 = vector.broadcast %63 : vector<16x1xf32> to vector<16x8xf32>
    %65 = arith.mulf %60, %64 : vector<16x8xf32>
    %66 = arith.truncf %65 : vector<16x8xf32> to vector<16x8xbf16>
    %cst_25 = arith.constant dense<0.000000e+00> : vector<16x16xf32>
    %67 = tpu.matmul %66, %54, %cst_25 {dimension_numbers = #tpu.dot_dimension_numbers<[1], [0], [0], [1], [0, 0, 1, 1], [], []>} : vector<16x8xbf16>, vector<8x16xbf16>, vector<16x16xf32> -> vector<16x16xf32>
    %68 = vector.extract_strided_slice %17 {offsets = [0, 48], sizes = [16, 16], strides = [1, 1]} : vector<16x64xbf16> to vector<16x16xbf16>
    %69 = vector.extract_strided_slice %18 {offsets = [0, 48], sizes = [8, 16], strides = [1, 1]} : vector<8x64xbf16> to vector<8x16xbf16>
    %70 = vector.extract_strided_slice %19 {offsets = [0, 48], sizes = [8, 16], strides = [1, 1]} : vector<8x64xbf16> to vector<8x16xbf16>
    %cst_26 = arith.constant dense<0.000000e+00> : vector<16x8xf32>
    %71 = tpu.matmul %68, %69, %cst_26 {dimension_numbers = #tpu.dot_dimension_numbers<[1], [1], [0], [0], [0, 0, 1, 0], [], []>} : vector<16x16xbf16>, vector<8x16xbf16>, vector<16x8xf32> -> vector<16x8xf32>
    %cst_27 = arith.constant dense<0xFF800000> : vector<16xf32>
    %72 = vector.multi_reduction <maximumf>, %71, %cst_27 [1] : vector<16x8xf32> to vector<16xf32>
    %73 = vector.shape_cast %72 : vector<16xf32> to vector<16x1xf32>
    %74 = vector.broadcast %73 : vector<16x1xf32> to vector<16x8xf32>
    %75 = arith.subf %71, %74 : vector<16x8xf32>
    %76 = math.exp %75 : vector<16x8xf32>
    %cst_28 = arith.constant dense<0.000000e+00> : vector<16xf32>
    %77 = vector.multi_reduction <add>, %76, %cst_28 [1] : vector<16x8xf32> to vector<16xf32>
    %78 = vector.shape_cast %77 : vector<16xf32> to vector<16x1xf32>
    %79 = tpu.reciprocal %78 {approx = true} : vector<16x1xf32> -> vector<16x1xf32>
    %80 = vector.broadcast %79 : vector<16x1xf32> to vector<16x8xf32>
    %81 = arith.mulf %76, %80 : vector<16x8xf32>
    %82 = arith.truncf %81 : vector<16x8xf32> to vector<16x8xbf16>
    %cst_29 = arith.constant dense<0.000000e+00> : vector<16x16xf32>
    %83 = tpu.matmul %82, %70, %cst_29 {dimension_numbers = #tpu.dot_dimension_numbers<[1], [0], [0], [1], [0, 0, 1, 1], [], []>} : vector<16x8xbf16>, vector<8x16xbf16>, vector<16x16xf32> -> vector<16x16xf32>
    %84 = tpu.concatenate %35, %51, %67, %83 in 1 : vector<16x16xf32>, vector<16x16xf32>, vector<16x16xf32>, vector<16x16xf32> -> vector<16x64xf32>
    %85 = arith.truncf %84 : vector<16x64xf32> to vector<16x64xbf16>
    %c0_30 = arith.constant 0 : index
    %c0_31 = arith.constant 0 : index
    %86 = vector.load %arg6[%c0_30, %c0_31] : memref<64x32xf32, #tpu.memory_space<vmem>>, vector<64x32xf32>
    %87 = arith.truncf %86 : vector<64x32xf32> to vector<64x32xbf16>
    %cst_32 = arith.constant dense<0.000000e+00> : vector<16x32xf32>
    %88 = tpu.matmul %85, %87, %cst_32 {dimension_numbers = #tpu.dot_dimension_numbers<[1], [0], [0], [1], [0, 0, 1, 1], [], []>} : vector<16x64xbf16>, vector<64x32xbf16>, vector<16x32xf32> -> vector<16x32xf32>
    %c0_33 = arith.constant 0 : index
    %c0_34 = arith.constant 0 : index
    %89 = vector.load %arg7[%c0_33, %c0_34] : memref<1x32xf32, #tpu.memory_space<vmem>>, vector<1x32xf32>
    %90 = vector.broadcast %89 : vector<1x32xf32> to vector<16x32xf32>
    %91 = arith.addf %88, %90 : vector<16x32xf32>
    %c0_35 = arith.constant 0 : index
    %c0_36 = arith.constant 0 : index
    %c0_37 = arith.constant 0 : index
    %92 = vector.load %arg8[%c0_35, %c0_36, %c0_37] : memref<1x16x32xf32, #tpu.memory_space<vmem>>, vector<1x16x32xf32>
    %93 = vector.shape_cast %92 : vector<1x16x32xf32> to vector<16x32xf32>
    %94 = vector.shape_cast %91 : vector<16x32xf32> to vector<1x16x32xf32>
    tpu.vector_store %arg8[%c0_35, %c0_36, %c0_37], %94 {strides = array<i32>} : memref<1x16x32xf32, #tpu.memory_space<vmem>>, vector<1x16x32xf32>,
    return
  }
  func.func @transform_0(%arg0: i32) -> (i32, i32, i32) {
    %c0_i32 = arith.constant 0 : i32
    %c0_i32_0 = arith.constant 0 : i32
    %c0_i32_1 = arith.constant 0 : i32
    return %arg0, %c0_i32, %c0_i32_0 : i32, i32, i32
  }
  func.func @transform_1(%arg0: i32) -> (i32, i32, i32) {
    %c0_i32 = arith.constant 0 : i32
    %c0_i32_0 = arith.constant 0 : i32
    %c0_i32_1 = arith.constant 0 : i32
    return %arg0, %c0_i32, %c0_i32_0 : i32, i32, i32
  }
  func.func @transform_2(%arg0: i32) -> (i32, i32) {
    %c0_i32 = arith.constant 0 : i32
    %c0_i32_0 = arith.constant 0 : i32
    %c0_i32_1 = arith.constant 0 : i32
    return %c0_i32, %c0_i32_0 : i32, i32
  }
  func.func @transform_3(%arg0: i32) -> (i32, i32) {
    %c0_i32 = arith.constant 0 : i32
    %c0_i32_0 = arith.constant 0 : i32
    %c0_i32_1 = arith.constant 0 : i32
    return %c0_i32, %c0_i32_0 : i32, i32
  }
  func.func @transform_4(%arg0: i32) -> (i32, i32) {
    %c0_i32 = arith.constant 0 : i32
    %c0_i32_0 = arith.constant 0 : i32
    %c0_i32_1 = arith.constant 0 : i32
    return %c0_i32, %c0_i32_0 : i32, i32
  }
  func.func @transform_5(%arg0: i32) -> (i32, i32) {
    %c0_i32 = arith.constant 0 : i32
    %c0_i32_0 = arith.constant 0 : i32
    %c0_i32_1 = arith.constant 0 : i32
    return %c0_i32, %c0_i32_0 : i32, i32
  }
  func.func @transform_6(%arg0: i32) -> (i32, i32) {
    %c0_i32 = arith.constant 0 : i32
    %c0_i32_0 = arith.constant 0 : i32
    %c0_i32_1 = arith.constant 0 : i32
    return %c0_i32, %c0_i32_0 : i32, i32
  }
  func.func @transform_7(%arg0: i32) -> (i32, i32, i32) {
    %c0_i32 = arith.constant 0 : i32
    %c0_i32_0 = arith.constant 0 : i32
    %c0_i32_1 = arith.constant 0 : i32
    return %arg0, %c0_i32, %c0_i32_0 : i32, i32, i32
  }
}

</mosaic_0001>

<llo_original>
// kernel: tpu_custom_call.1
$region0: #{tpu_custom_call.1}
  #allocation0 [shape = 'u32[]', space=smem, size = 0x4, offset = 0x4, fixed_abs, tag = 'smem constant byte address 0x4 - core index']
  #allocation1 [shape = 'u32[144,128]{1,0:T(1,128)}', space=vmem, size = 0x12000, scoped, tag = 'internal scratch']
  %s0 = inlined_call_operand.vmem [shape: f32[2,16,32], index: 0, kind: input, shape index: {}]
  %s1 = inlined_call_operand.hbm [shape: f32[2,8,32], index: 1, kind: input, shape index: {}]
  %s2 = inlined_call_operand.vmem [shape: f32[32,64], index: 2, kind: input, shape index: {}]
  %s3 = inlined_call_operand.vmem [shape: f32[32,64], index: 3, kind: input, shape index: {}]
  %s4 = inlined_call_operand.hbm [shape: f32[32,64], index: 4, kind: input, shape index: {}]
  %s5 = inlined_call_operand.vmem [shape: f32[64,32], index: 5, kind: input, shape index: {}]
  %s6 = inlined_call_operand.vmem [shape: f32[1,32], index: 6, kind: input, shape index: {}]
  %s7 = inlined_call_operand.hbm [shape: f32[2,16,32], index: 7, kind: output, shape index: {}]
  %s8 = sld [smem:[#allocation0]]
  $region69: #{tpu_custom_call.1} parent=0
    _
  %s10 = ssub.s32 1, %s8
  %s11 = scalar_select 0, %s10, %s8
  $region1: #{tpu_custom_call.1} parent=0
    #allocation2 [shape = 'u8[8192]{0}', space=vmem, size = 0x2000, scoped, tag = 'input window, operand 1']
    #allocation3 [shape = 's32[2]{0}', space=sflag, size = 0x8, scoped, tag = 'scoped memory for tpu_custom_call.1']
    #allocation4 [shape = 's32[2]{0}', space=sflag, size = 0x8, scoped, tag = 'scoped memory for tpu_custom_call.1']
    #allocation5 [shape = 'u8[16384]{0}', space=vmem, size = 0x4000, scoped, tag = 'input window, operand 4, single buffered']
    #allocation6 [shape = 's32[1]{0}', space=sflag, size = 0x4, scoped, tag = 'scoped memory for tpu_custom_call.1']
    #allocation7 [shape = 'u8[16384]{0}', space=vmem, size = 0x4000, scoped, tag = 'output window, operand 0']
    %12 = vsyncpa [#allocation3], 0
    %s13 = scalar_lea.sflag [#allocation3], 1
    %14 = vsyncpa %s13, 0
    %15 = vsyncpa [#allocation6], 0
    %16 = vsyncpa [#allocation4], 0
    %s17 = scalar_lea.sflag [#allocation4], 1
    %18 = vsyncpa %s17, 0
    loop: start=0, step=1, limit=4
    $region2: #{tpu_custom_call.1} parent=1 // loop_pre_header
      _
    $region3: #{tpu_custom_call.1} parent=1 // loop_header
      %s20 = sphi 0, %s24
      %p21 = scmp.ge.s32.totalorder %s20, 4
      %s30 = sphi 0, %s32
      %s33 = sphi 0, %s30
      %s34 = sphi 0, %s33
      %s50 = sphi 0, %s34
      %s56 = sphi 0, %s58
      %s59 = sphi 0, %s56
      %s60 = sphi 0, %s59
      %s76 = sphi 0, %s60
      %s80 = sphi 0, %s80
      %s82 = sphi 0, %s80
      %s83 = sphi 0, %s82
      %s97 = sphi 0, %s83
      %s101 = sphi 0, %s101
      %s103 = sphi 0, %s101
      %s104 = sphi 0, %s103
      %s118 = sphi 0, %s104
      %s122 = sphi 0, %s122
      %s124 = sphi 0, %s122
      %s125 = sphi 0, %s124
      %s139 = sphi 0, %s125
      %s143 = sphi 0, %s143
      %s145 = sphi 0, %s143
      %s146 = sphi 0, %s145
      %s160 = sphi 0, %s146
      %s164 = sphi 0, %s164
      %s166 = sphi 0, %s164
      %s167 = sphi 0, %s166
      %s181 = sphi 0, %s167
      %s187 = sphi 0, %s189
      %s190 = sphi 0, %s187
      %s191 = sphi 0, %s190
      %s207 = sphi 0, %s191
    $region4: #{tpu_custom_call.1} parent=1 // loop_header_branch
      %23 = sbr.rel (%p21) target = $region8
    $region5: #{tpu_custom_call.1} parent=1 // loop_body
      %s25 = ssub.s32 %s20, 1
      %s26 = ssub.s32 %s20, 2
      %s27 = sadd.s32 %s20, 1
      %s28 = ssub.s32 %s20, %s27
      %p29 = scmp.eq.s32.totalorder %s28, 0
      %s31 = sadd.s32 %s30, 1
      %s32 = scalar_select %p29, %s30, %s31
      %p35 = pneg %p29
      %p36 = scmp.eq.s32.totalorder %s20, 1
      %p37 = por %p35, %p36
      %p38 = scmp.ne.s32.totalorder %s30, %s33
      %p39 = scmp.eq.s32.totalorder %s20, 0
      %p40 = por %p38, %p39
      %p41 = scmp.ne.s32.totalorder %s30, %s33
      %p42 = scmp.eq.s32.totalorder %s25, 1
      %p43 = por %p41, %p42
      %p44 = scmp.ne.s32.totalorder %s33, %s34
      %p45 = scmp.eq.s32.totalorder %s25, 0
      %p46 = por %p44, %p45
      %p47 = scmp.ne.s32.totalorder %s33, %s34
      %p48 = scmp.eq.s32.totalorder %s26, 1
      %p49 = por %p47, %p48
      %p51 = scmp.ne.s32.totalorder %s34, %s50
      %p52 = scmp.eq.s32.totalorder %s26, 0
      %p53 = por %p51, %p52
      %s54 = ssub.s32 %s20, %s27
      %p55 = scmp.eq.s32.totalorder %s54, 0
      %s57 = sadd.s32 %s56, 1
      %s58 = scalar_select %p55, %s56, %s57
      %p61 = pneg %p55
      %p62 = scmp.eq.s32.totalorder %s20, 1
      %p63 = por %p61, %p62
      %p64 = scmp.ne.s32.totalorder %s56, %s59
      %p65 = scmp.eq.s32.totalorder %s20, 0
      %p66 = por %p64, %p65
      %p67 = scmp.ne.s32.totalorder %s56, %s59
      %p68 = scmp.eq.s32.totalorder %s25, 1
      %p69 = por %p67, %p68
      %p70 = scmp.ne.s32.totalorder %s59, %s60
      %p71 = scmp.eq.s32.totalorder %s25, 0
      %p72 = por %p70, %p71
      %p73 = scmp.ne.s32.totalorder %s59, %s60
      %p74 = scmp.eq.s32.totalorder %s26, 1
      %p75 = por %p73, %p74
      %p77 = scmp.ne.s32.totalorder %s60, %s76
      %p78 = scmp.eq.s32.totalorder %s26, 0
      %p79 = por %p77, %p78
      %s81 = sadd.s32 %s80, 1
      %p84 = scmp.eq.s32.totalorder %s20, 1
      %p85 = scmp.ne.s32.totalorder %s80, %s82
      %p86 = scmp.eq.s32.totalorder %s20, 0
      %p87 = por %p85, %p86
      %p88 = scmp.ne.s32.totalorder %s80, %s82
      %p89 = scmp.eq.s32.totalorder %s25, 1
      %p90 = por %p88, %p89
      %p91 = scmp.ne.s32.totalorder %s82, %s83
      %p92 = scmp.eq.s32.totalorder %s25, 0
      %p93 = por %p91, %p92
      %p94 = scmp.ne.s32.totalorder %s82, %s83
      %p95 = scmp.eq.s32.totalorder %s26, 1
      %p96 = por %p94, %p95
      %p98 = scmp.ne.s32.totalorder %s83, %s97
      %p99 = scmp.eq.s32.totalorder %s26, 0
      %p100 = por %p98, %p99
      %s102 = sadd.s32 %s101, 1
      %p105 = scmp.eq.s32.totalorder %s20, 1
      %p106 = scmp.ne.s32.totalorder %s101, %s103
      %p107 = scmp.eq.s32.totalorder %s20, 0
      %p108 = por %p106, %p107
      %p109 = scmp.ne.s32.totalorder %s101, %s103
      %p110 = scmp.eq.s32.totalorder %s25, 1
      %p111 = por %p109, %p110
      %p112 = scmp.ne.s32.totalorder %s103, %s104
      %p113 = scmp.eq.s32.totalorder %s25, 0
      %p114 = por %p112, %p113
      %p115 = scmp.ne.s32.totalorder %s103, %s104
      %p116 = scmp.eq.s32.totalorder %s26, 1
      %p117 = por %p115, %p116
      %p119 = scmp.ne.s32.totalorder %s104, %s118
      %p120 = scmp.eq.s32.totalorder %s26, 0
      %p121 = por %p119, %p120
      %s123 = sadd.s32 %s122, 1
      %p126 = scmp.eq.s32.totalorder %s20, 1
      %p127 = scmp.ne.s32.totalorder %s122, %s124
      %p128 = scmp.eq.s32.totalorder %s20, 0
      %p129 = por %p127, %p128
      %p130 = scmp.ne.s32.totalorder %s122, %s124
      %p131 = scmp.eq.s32.totalorder %s25, 1
      %p132 = por %p130, %p131
      %p133 = scmp.ne.s32.totalorder %s124, %s125
      %p134 = scmp.eq.s32.totalorder %s25, 0
      %p135 = por %p133, %p134
      %p136 = scmp.ne.s32.totalorder %s124, %s125
      %p137 = scmp.eq.s32.totalorder %s26, 1
      %p138 = por %p136, %p137
      %p140 = scmp.ne.s32.totalorder %s125, %s139
      %p141 = scmp.eq.s32.totalorder %s26, 0
      %p142 = por %p140, %p141
      %s144 = sadd.s32 %s143, 1
      %p147 = scmp.eq.s32.totalorder %s20, 1
      %p148 = scmp.ne.s32.totalorder %s143, %s145
      %p149 = scmp.eq.s32.totalorder %s20, 0
      %p150 = por %p148, %p149
      %p151 = scmp.ne.s32.totalorder %s143, %s145
      %p152 = scmp.eq.s32.totalorder %s25, 1
      %p153 = por %p151, %p152
      %p154 = scmp.ne.s32.totalorder %s145, %s146
      %p155 = scmp.eq.s32.totalorder %s25, 0
      %p156 = por %p154, %p155
      %p157 = scmp.ne.s32.totalorder %s145, %s146
      %p158 = scmp.eq.s32.totalorder %s26, 1
      %p159 = por %p157, %p158
      %p161 = scmp.ne.s32.totalorder %s146, %s160
      %p162 = scmp.eq.s32.totalorder %s26, 0
      %p163 = por %p161, %p162
      %s165 = sadd.s32 %s164, 1
      %p168 = scmp.eq.s32.totalorder %s20, 1
      %p169 = scmp.ne.s32.totalorder %s164, %s166
      %p170 = scmp.eq.s32.totalorder %s20, 0
      %p171 = por %p169, %p170
      %p172 = scmp.ne.s32.totalorder %s164, %s166
      %p173 = scmp.eq.s32.totalorder %s25, 1
      %p174 = por %p172, %p173
      %p175 = scmp.ne.s32.totalorder %s166, %s167
      %p176 = scmp.eq.s32.totalorder %s25, 0
      %p177 = por %p175, %p176
      %p178 = scmp.ne.s32.totalorder %s166, %s167
      %p179 = scmp.eq.s32.totalorder %s26, 1
      %p180 = por %p178, %p179
      %p182 = scmp.ne.s32.totalorder %s167, %s181
      %p183 = scmp.eq.s32.totalorder %s26, 0
      %p184 = por %p182, %p183
      %s185 = ssub.s32 %s20, %s27
      %p186 = scmp.eq.s32.totalorder %s185, 0
      %s188 = sadd.s32 %s187, 1
      %s189 = scalar_select %p186, %s187, %s188
      %p192 = pneg %p186
      %p193 = scmp.eq.s32.totalorder %s20, 1
      %p194 = por %p192, %p193
      %p195 = scmp.ne.s32.totalorder %s187, %s190
      %p196 = scmp.eq.s32.totalorder %s20, 0
      %p197 = por %p195, %p196
      %p198 = scmp.ne.s32.totalorder %s187, %s190
      %p199 = scmp.eq.s32.totalorder %s25, 1
      %p200 = por %p198, %p199
      %p201 = scmp.ne.s32.totalorder %s190, %s191
      %p202 = scmp.eq.s32.totalorder %s25, 0
      %p203 = por %p201, %p202
      %p204 = scmp.ne.s32.totalorder %s190, %s191
      %p205 = scmp.eq.s32.totalorder %s26, 1
      %p206 = por %p204, %p205
      %p208 = scmp.ne.s32.totalorder %s191, %s207
      %p209 = scmp.eq.s32.totalorder %s26, 0
      %p210 = por %p208, %p209
      %p211 = scmp.le.s32.totalorder 1, %s20
      %p212 = scmp.lt.s32.totalorder %s20, 3
      %p213 = pnand %p211, %p212
      %p214 = pneg %p213
      // Predicated region
      $region9: #{tpu_custom_call.1} parent=5 // pred_check
        _
      $region10: #{tpu_custom_call.1} parent=5 // pred_check_branch
        %216 = sbr.rel (%p213) target = $region12
      $region11: #{tpu_custom_call.1} parent=5 // pred_region
        %s217 = ssub.s32 %s20, 1
        // Predicated region
        $region13: #{tpu_custom_call.1} parent=11 // pred_check
          %p218 = pneg %p93
        $region14: #{tpu_custom_call.1} parent=11 // pred_check_branch
          %220 = sbr.rel (%p218) target = $region16
        $region15: #{tpu_custom_call.1} parent=11 // pred_region
          _
        $region16: #{tpu_custom_call.1} parent=11 // pred_fallthru
          _
        // Predicated region
        $region17: #{tpu_custom_call.1} parent=11 // pred_check
          %p221 = pneg %p114
        $region18: #{tpu_custom_call.1} parent=11 // pred_check_branch
          %223 = sbr.rel (%p221) target = $region20
        $region19: #{tpu_custom_call.1} parent=11 // pred_region
          _
        $region20: #{tpu_custom_call.1} parent=11 // pred_fallthru
          _
        // Predicated region
        $region21: #{tpu_custom_call.1} parent=11 // pred_check
          %p224 = pneg %p135
        $region22: #{tpu_custom_call.1} parent=11 // pred_check_branch
          %226 = sbr.rel (%p224) target = $region24
        $region23: #{tpu_custom_call.1} parent=11 // pred_region
          %s228 = ssub.s32 512, 512
          %229 = vsyncadd [#allocation6], %s228
          %s230 = sshll.u32 [#allocation5], 4
          %s231 = int_to_ptr.vmem [resolvable:$true] %s230
          %236 = dma.hbm_to_vmem [thread:$0]  %s4, 512, %s231, [#allocation6], 128, 128, 8
        $region24: #{tpu_custom_call.1} parent=11 // pred_fallthru
          _
        // Predicated region
        $region25: #{tpu_custom_call.1} parent=11 // pred_check
          %p237 = pneg %p156
        $region26: #{tpu_custom_call.1} parent=11 // pred_check_branch
          %239 = sbr.rel (%p237) target = $region28
        $region27: #{tpu_custom_call.1} parent=11 // pred_region
          _
        $region28: #{tpu_custom_call.1} parent=11 // pred_fallthru
          _
        // Predicated region
        $region29: #{tpu_custom_call.1} parent=11 // pred_check
          %p240 = pneg %p177
        $region30: #{tpu_custom_call.1} parent=11 // pred_check_branch
          %242 = sbr.rel (%p240) target = $region32
        $region31: #{tpu_custom_call.1} parent=11 // pred_region
          _
        $region32: #{tpu_custom_call.1} parent=11 // pred_fallthru
          _
      $region12: #{tpu_custom_call.1} parent=5 // pred_fallthru
        _
      %p243 = scmp.lt.s32.totalorder %s20, 2
      // Predicated region
      $region33: #{tpu_custom_call.1} parent=5 // pred_check
        %p244 = pneg %p243
      $region34: #{tpu_custom_call.1} parent=5 // pred_check_branch
        %246 = sbr.rel (%p244) target = $region36
      $region35: #{tpu_custom_call.1} parent=5 // pred_region
        // Predicated region
        $region37: #{tpu_custom_call.1} parent=35 // pred_check
          %p247 = pneg %p40
        $region38: #{tpu_custom_call.1} parent=35 // pred_check_branch
          %249 = sbr.rel (%p247) target = $region40
        $region39: #{tpu_custom_call.1} parent=35 // pred_region
          %p250 = scmp.lt.s32.totalorder %s20, 1
          %s251 = scalar_select %p250, %s20, 1
          %s252 = smul.addr %s251, 2
          %s253 = smul.addr %s252, 8
          %s254 = scalar_lea.vmem %s0, %s253
        $region40: #{tpu_custom_call.1} parent=35 // pred_fallthru
          _
        // Predicated region
        $region41: #{tpu_custom_call.1} parent=35 // pred_check
          %p255 = pneg %p66
        $region42: #{tpu_custom_call.1} parent=35 // pred_check_branch
          %257 = sbr.rel (%p255) target = $region44
        $region43: #{tpu_custom_call.1} parent=35 // pred_region
          %s258 = sand.u32 %s56, 1
          %s259 = scalar_lea.sflag [#allocation3], %s258
          %s260 = sand.u32 %s56, 1
          %s261 = smul.addr %s260, 8
          %s262 = scalar_lea.vmem [#allocation2], %s261
          %s264 = ssub.s32 128, 128
          %265 = vsyncadd %s259, %s264
          %s266 = smul.addr %s20, 128
          %s267 = scalar_lea.hbm %s1, %s266
          %s269 = sshll.u32 %s262, 4
          %s270 = int_to_ptr.vmem [resolvable:$true] %s269
          %272 = dma.hbm_to_vmem [thread:$0]  %s267, 128, %s270, %s259
        $region44: #{tpu_custom_call.1} parent=35 // pred_fallthru
          _
      $region36: #{tpu_custom_call.1} parent=5 // pred_fallthru
        _
      %p273 = scmp.le.s32.totalorder 1, %s20
      %p274 = scmp.lt.s32.totalorder %s20, 3
      %p275 = pnand %p273, %p274
      %p276 = pneg %p275
      // Predicated region
      $region45: #{tpu_custom_call.1} parent=5 // pred_check
        _
      $region46: #{tpu_custom_call.1} parent=5 // pred_check_branch
        %278 = sbr.rel (%p275) target = $region48
      $region47: #{tpu_custom_call.1} parent=5 // pred_region
        %s279 = ssub.s32 %s20, 1
        %s280 = sand.u32 %s59, 1
        %s281 = scalar_lea.sflag [#allocation3], %s280
        %s282 = sand.u32 %s59, 1
        %s283 = smul.addr %s282, 8
        %s284 = scalar_lea.vmem [#allocation2], %s283
        // Predicated region
        $region49: #{tpu_custom_call.1} parent=47 // pred_check
          %p285 = pneg %p72
        $region50: #{tpu_custom_call.1} parent=47 // pred_check_branch
          %287 = sbr.rel (%p285) target = $region52
        $region51: #{tpu_custom_call.1} parent=47 // pred_region
          %288 = dma.done %s281, 128
        $region52: #{tpu_custom_call.1} parent=47 // pred_fallthru
          _
        // Predicated region
        $region53: #{tpu_custom_call.1} parent=47 // pred_check
          %p289 = pneg %p135
        $region54: #{tpu_custom_call.1} parent=47 // pred_check_branch
          %291 = sbr.rel (%p289) target = $region56
        $region55: #{tpu_custom_call.1} parent=47 // pred_region
          %292 = dma.done [#allocation6], 512
        $region56: #{tpu_custom_call.1} parent=47 // pred_fallthru
          _
        %p293 = scmp.lt.s32.totalorder %s25, 1
        %s294 = scalar_select %p293, %s25, 1
        %s295 = smul.addr %s294, 2
        %s296 = smul.addr %s295, 8
        %s297 = scalar_lea.vmem %s0, %s296
        %p298 = pneg %p46
        %p299 = pneg %p43
        %s300 = sand.u32 %s59, 1
        %s301 = scalar_lea.sflag [#allocation3], %s300
        %s302 = sand.u32 %s59, 1
        %s303 = smul.addr %s302, 8
        %s304 = scalar_lea.vmem [#allocation2], %s303
        %p305 = pneg %p72
        %p306 = pneg %p69
        %p307 = pneg %p93
        %p308 = pneg %p90
        %p309 = pneg %p114
        %p310 = pneg %p111
        %p311 = pneg %p135
        %p312 = pneg %p132
        %p313 = pneg %p156
        %p314 = pneg %p153
        %p315 = pneg %p177
        %p316 = pneg %p174
        %p317 = pneg %p203
        %p318 = pneg %p200
        %s319 = sand.u32 %s190, 1
        %s320 = scalar_lea.sflag [#allocation4], %s319
        %s321 = sand.u32 %s190, 1
        %s322 = smul.addr %s321, 16
        %s323 = scalar_lea.vmem [#allocation7], %s322
        %p324 = scmp.lt.s32.totalorder %s25, 1
        %s325 = scalar_select %p324, %s25, 1
        %s326 = smul.addr %s325, 2
        %s327 = smul.addr %s326, 8
        %s328 = scalar_lea.vmem %s0, %s327
        %v330 = vld [vmem:[%s328] sm:$0xff]
        %v331 = vld [vmem:[%s328 + $0x8] sm:$0xff]
        %v332 = vpack.c.bf16 %v331, %v330
        %v333 = vld [vmem:[%s284] sm:$0xff]
        %v334 = vpack.c.bf16 %v333, %v333
        %v335 = vld [vmem:[%s2] sm:$0xff]
        %v336 = vld [vmem:[%s2 + $0x8] sm:$0xff]
        %v337 = vld [vmem:[%s2 + $0x10] sm:$0xff]
        %v338 = vld [vmem:[%s2 + $0x18] sm:$0xff]
        %v339 = vpack.c.bf16 %v336, %v335
        %v340 = vpack.c.bf16 %v338, %v337
        %vm341 = vcmask 261120
        %v343 = vsel %vm341, %v332, 0
        %345 = vmatprep.subr.bf16.mxu0 0
        %346 = vmatpush1.bf16.msra.mxu0 %v339
        %347 = vmatprep.subr.bf16.mxu0 0
        %348 = vmatpush1.bf16.msra.mxu0 %v340
        %349 = vmatprep.subr.bf16.mxu0 0
        %350 = vmatpush1.bf16.msra.mxu0 0
        %351 = vmatprep.subr.bf16.mxu0 0
        %352 = vmatpush1.bf16.msra.mxu0 0
        %353 = vmatprep.subr.bf16.mxu0 0
        %354 = vmatpush1.bf16.msra.mxu0 0
        %355 = vmatprep.subr.bf16.mxu0 0
        %356 = vmatpush1.bf16.msra.mxu0 0
        %357 = vmatprep.subr.bf16.mxu0 0
        %358 = vmatpush1.bf16.msra.mxu0 0
        %359 = vmatprep.subr.bf16.mxu0 0
        %360 = vmatpush1.bf16.msra.mxu0 0
        %361 = vmatprep.subr.bf16.mxu0 0
        %362 = vmatpush1.bf16.msra.mxu0 0
        %363 = vmatprep.subr.bf16.mxu0 0
        %364 = vmatpush1.bf16.msra.mxu0 0
        %365 = vmatprep.subr.bf16.mxu0 0
        %366 = vmatpush1.bf16.msra.mxu0 0
        %367 = vmatprep.subr.bf16.mxu0 0
        %368 = vmatpush1.bf16.msra.mxu0 0
        %369 = vmatprep.subr.bf16.mxu0 0
        %370 = vmatpush1.bf16.msra.mxu0 0
        %371 = vmatprep.subr.bf16.mxu0 0
        %372 = vmatpush1.bf16.msra.mxu0 0
        %373 = vmatprep.subr.bf16.mxu0 0
        %374 = vmatpush1.bf16.msra.mxu0 0
        %375 = vmatprep.subr.bf16.mxu0 0
        %376 = vmatpush1.bf16.msra.mxu0 0
        %377 = vmatprep.mubr.bf16.mxu0 0
        %378 = vmatmul.mubr.bf16.gmra.mrb[0].mxu0 %v343
        %v379 = vpop.f32.mrb[0].mxu0
        %v380 = vadd.f32 0.0, %v379
        %v381 = vpop.f32.mrb[0].mxu0
        %v382 = vpop.f32.mrb[0].mxu0
        %v383 = vadd.f32 0.0, %v382
        %v384 = vpop.f32.mrb[0].mxu0
        %385 = vdwg.mxu0
        %v386 = vld [vmem:[%s3] sm:$0xff]
        %v387 = vld [vmem:[%s3 + $0x8] sm:$0xff]
        %v388 = vld [vmem:[%s3 + $0x10] sm:$0xff]
        %v389 = vld [vmem:[%s3 + $0x18] sm:$0xff]
        %v390 = vpack.c.bf16 %v387, %v386
        %v391 = vpack.c.bf16 %v389, %v388
        %v393 = vsel %vm341, %v334, 0
        %395 = vmatprep.subr.bf16.mxu0 0
        %396 = vmatpush1.bf16.msra.mxu0 %v390
        %397 = vmatprep.subr.bf16.mxu0 0
        %398 = vmatpush1.bf16.msra.mxu0 %v391
        %399 = vmatprep.subr.bf16.mxu0 0
        %400 = vmatpush1.bf16.msra.mxu0 0
        %401 = vmatprep.subr.bf16.mxu0 0
        %402 = vmatpush1.bf16.msra.mxu0 0
        %403 = vmatprep.subr.bf16.mxu0 0
        %404 = vmatpush1.bf16.msra.mxu0 0
        %405 = vmatprep.subr.bf16.mxu0 0
        %406 = vmatpush1.bf16.msra.mxu0 0
        %407 = vmatprep.subr.bf16.mxu0 0
        %408 = vmatpush1.bf16.msra.mxu0 0
        %409 = vmatprep.subr.bf16.mxu0 0
        %410 = vmatpush1.bf16.msra.mxu0 0
        %411 = vmatprep.subr.bf16.mxu0 0
        %412 = vmatpush1.bf16.msra.mxu0 0
        %413 = vmatprep.subr.bf16.mxu0 0
        %414 = vmatpush1.bf16.msra.mxu0 0
        %415 = vmatprep.subr.bf16.mxu0 0
        %416 = vmatpush1.bf16.msra.mxu0 0
        %417 = vmatprep.subr.bf16.mxu0 0
        %418 = vmatpush1.bf16.msra.mxu0 0
        %419 = vmatprep.subr.bf16.mxu0 0
        %420 = vmatpush1.bf16.msra.mxu0 0
        %421 = vmatprep.subr.bf16.mxu0 0
        %422 = vmatpush1.bf16.msra.mxu0 0
        %423 = vmatprep.subr.bf16.mxu0 0
        %424 = vmatpush1.bf16.msra.mxu0 0
        %425 = vmatprep.subr.bf16.mxu0 0
        %426 = vmatpush1.bf16.msra.mxu0 0
        %427 = vmatprep.mubr.bf16.mxu0 0
        %428 = vmatmul.mubr.bf16.gmra.mrb[0].mxu0 %v393
        %v429 = vpop.f32.mrb[0].mxu0
        %v430 = vadd.f32 0.0, %v429
        %v431 = vpop.f32.mrb[0].mxu0
        %v432 = vpop.f32.mrb[0].mxu0
        %v433 = vpop.f32.mrb[0].mxu0
        %434 = vdwg.mxu0
        %v435 = vld [vmem:[#allocation5] sm:$0xff]
        %v436 = vld [vmem:[#allocation5 + $0x8] sm:$0xff]
        %v437 = vld [vmem:[#allocation5 + $0x10] sm:$0xff]
        %v438 = vld [vmem:[#allocation5 + $0x18] sm:$0xff]
        %v439 = vpack.c.bf16 %v436, %v435
        %v440 = vpack.c.bf16 %v438, %v437
        %441 = vmatprep.subr.bf16.mxu0 0
        %442 = vmatpush1.bf16.msra.mxu0 %v439
        %443 = vmatprep.subr.bf16.mxu0 0
        %444 = vmatpush1.bf16.msra.mxu0 %v440
        %445 = vmatprep.subr.bf16.mxu0 0
        %446 = vmatpush1.bf16.msra.mxu0 0
        %447 = vmatprep.subr.bf16.mxu0 0
        %448 = vmatpush1.bf16.msra.mxu0 0
        %449 = vmatprep.subr.bf16.mxu0 0
        %450 = vmatpush1.bf16.msra.mxu0 0
        %451 = vmatprep.subr.bf16.mxu0 0
        %452 = vmatpush1.bf16.msra.mxu0 0
        %453 = vmatprep.subr.bf16.mxu0 0
        %454 = vmatpush1.bf16.msra.mxu0 0
        %455 = vmatprep.subr.bf16.mxu0 0
        %456 = vmatpush1.bf16.msra.mxu0 0
        %457 = vmatprep.subr.bf16.mxu0 0
        %458 = vmatpush1.bf16.msra.mxu0 0
        %459 = vmatprep.subr.bf16.mxu0 0
        %460 = vmatpush1.bf16.msra.mxu0 0
        %461 = vmatprep.subr.bf16.mxu0 0
        %462 = vmatpush1.bf16.msra.mxu0 0
        %463 = vmatprep.subr.bf16.mxu0 0
        %464 = vmatpush1.bf16.msra.mxu0 0
        %465 = vmatprep.subr.bf16.mxu0 0
        %466 = vmatpush1.bf16.msra.mxu0 0
        %467 = vmatprep.subr.bf16.mxu0 0
        %468 = vmatpush1.bf16.msra.mxu0 0
        %469 = vmatprep.subr.bf16.mxu0 0
        %470 = vmatpush1.bf16.msra.mxu0 0
        %471 = vmatprep.subr.bf16.mxu0 0
        %472 = vmatpush1.bf16.msra.mxu0 0
        %473 = vmatprep.mubr.bf16.mxu0 0
        %474 = vmatmul.mubr.bf16.gmra.mrb[0].mxu0 %v393
        %v475 = vpop.f32.mrb[0].mxu0
        %v476 = vadd.f32 0.0, %v475
        %v477 = vpop.f32.mrb[0].mxu0
        %v478 = vpop.f32.mrb[0].mxu0
        %v479 = vpop.f32.mrb[0].mxu0
        %480 = vdwg.mxu0
        %v481 = vmul.f32 %v380, 0.25
        %v482 = vmul.f32 %v383, 0.25
        %v483 = vpack.c.bf16 %v482, %v481
        %v484 = vpack.c.bf16 %v430, %v430
        %v485 = vpack.c.bf16 %v476, %v476
        %vm486 = vcmask 130048
        %v488 = vsel %vm486, %v483, 0
        %v491 = vsel %vm486, %v484, 0
        %493 = vmatprep.subr.bf16.mxu0 0
        %494 = vmatpush1.bf16.xpose.msra.mxu0 %v491
        %495 = vmatprep.subr.bf16.mxu0 0
        %496 = vmatpush1.bf16.xpose.msra.mxu0 0
        %497 = vmatprep.subr.bf16.mxu0 0
        %498 = vmatpush1.bf16.xpose.msra.mxu0 0
        %499 = vmatprep.subr.bf16.mxu0 0
        %500 = vmatpush1.bf16.xpose.msra.mxu0 0
        %501 = vmatprep.subr.bf16.mxu0 0
        %502 = vmatpush1.bf16.xpose.msra.mxu0 0
        %503 = vmatprep.subr.bf16.mxu0 0
        %504 = vmatpush1.bf16.xpose.msra.mxu0 0
        %505 = vmatprep.subr.bf16.mxu0 0
        %506 = vmatpush1.bf16.xpose.msra.mxu0 0
        %507 = vmatprep.subr.bf16.mxu0 0
        %508 = vmatpush1.bf16.xpose.msra.mxu0 0
        %509 = vmatprep.subr.bf16.mxu0 0
        %510 = vmatpush1.bf16.xpose.msra.mxu0 0
        %511 = vmatprep.subr.bf16.mxu0 0
        %512 = vmatpush1.bf16.xpose.msra.mxu0 0
        %513 = vmatprep.subr.bf16.mxu0 0
        %514 = vmatpush1.bf16.xpose.msra.mxu0 0
        %515 = vmatprep.subr.bf16.mxu0 0
        %516 = vmatpush1.bf16.xpose.msra.mxu0 0
        %517 = vmatprep.subr.bf16.mxu0 0
        %518 = vmatpush1.bf16.xpose.msra.mxu0 0
        %519 = vmatprep.subr.bf16.mxu0 0
        %520 = vmatpush1.bf16.xpose.msra.mxu0 0
        %521 = vmatprep.subr.bf16.mxu0 0
        %522 = vmatpush1.bf16.xpose.msra.mxu0 0
        %523 = vmatprep.subr.bf16.mxu0 0
        %524 = vmatpush1.bf16.xpose.msra.mxu0 0
        %525 = vmatprep.mubr.bf16.mxu0 0
        %526 = vmatmul.mubr.bf16.gmra.mrb[0].mxu0 %v488
        %v527 = vpop.f32.mrb[0].mxu0
        %v528 = vadd.f32 0.0, %v527
        %v529 = vpop.f32.mrb[0].mxu0
        %v530 = vpop.f32.mrb[0].mxu0
        %v531 = vadd.f32 0.0, %v530
        %v532 = vpop.f32.mrb[0].mxu0
        %533 = vdwg.mxu0
        %vm534 = vcmask 64512
        %v535 = vsel %vm534, %v528, -inf
        %536 = vmax.xlane.f32.xlu0 %v535
        %v537 = vpop.xlane.xlu0 %536
        %v538 = vsel %vm534, %v531, -inf
        %539 = vmax.xlane.f32.xlu0 %v538
        %v540 = vpop.xlane.xlu0 %539
        %v541 = vsub.f32 %v528, %v537
        %v542 = vsub.f32 %v531, %v540
        %v543 = vmul.f32 %v541, 1.442695
        %v544 = vpow.pop %v543
        %v545 = vmul.f32 %v542, 1.442695
        %v546 = vpow.pop %v545
        %v547 = vsel %vm534, %v544, 0.0
        %548 = vadd.xlane.f32.xlu0 %v547
        %v549 = vpop.xlane.xlu0 %548
        %v550 = vsel %vm534, %v546, 0.0
        %551 = vadd.xlane.f32.xlu0 %v550
        %v552 = vpop.xlane.xlu0 %551
        %v553 = vrcp.pop %v549
        %v554 = vrcp.pop %v552
        %v555 = vmul.f32 %v544, %v553
        %v556 = vmul.f32 %v546, %v554
        %v557 = vpack.c.bf16 %v556, %v555
        %v559 = vsel %vm534, %v557, 0
        %vm561 = vcmask 1043456
        %v563 = vsel %vm561, %v485, 0
        %565 = vmatprep.subr.bf16.mxu0 0
        %566 = vmatpush1.bf16.msra.mxu0 %v563
        %567 = vmatprep.subr.bf16.mxu0 0
        %568 = vmatpush1.bf16.msra.mxu0 0
        %569 = vmatprep.subr.bf16.mxu0 0
        %570 = vmatpush1.bf16.msra.mxu0 0
        %571 = vmatprep.subr.bf16.mxu0 0
        %572 = vmatpush1.bf16.msra.mxu0 0
        %573 = vmatprep.subr.bf16.mxu0 0
        %574 = vmatpush1.bf16.msra.mxu0 0
        %575 = vmatprep.subr.bf16.mxu0 0
        %576 = vmatpush1.bf16.msra.mxu0 0
        %577 = vmatprep.subr.bf16.mxu0 0
        %578 = vmatpush1.bf16.msra.mxu0 0
        %579 = vmatprep.subr.bf16.mxu0 0
        %580 = vmatpush1.bf16.msra.mxu0 0
        %581 = vmatprep.subr.bf16.mxu0 0
        %582 = vmatpush1.bf16.msra.mxu0 0
        %583 = vmatprep.subr.bf16.mxu0 0
        %584 = vmatpush1.bf16.msra.mxu0 0
        %585 = vmatprep.subr.bf16.mxu0 0
        %586 = vmatpush1.bf16.msra.mxu0 0
        %587 = vmatprep.subr.bf16.mxu0 0
        %588 = vmatpush1.bf16.msra.mxu0 0
        %589 = vmatprep.subr.bf16.mxu0 0
        %590 = vmatpush1.bf16.msra.mxu0 0
        %591 = vmatprep.subr.bf16.mxu0 0
        %592 = vmatpush1.bf16.msra.mxu0 0
        %593 = vmatprep.subr.bf16.mxu0 0
        %594 = vmatpush1.bf16.msra.mxu0 0
        %595 = vmatprep.subr.bf16.mxu0 0
        %596 = vmatpush1.bf16.msra.mxu0 0
        %597 = vmatprep.mubr.bf16.mxu0 0
        %598 = vmatmul.mubr.bf16.gmra.mrb[0].mxu0 %v559
        %v599 = vpop.f32.mrb[0].mxu0
        %v600 = vadd.f32 0.0, %v599
        %v601 = vpop.f32.mrb[0].mxu0
        %v602 = vpop.f32.mrb[0].mxu0
        %v603 = vadd.f32 0.0, %v602
        %v604 = vpop.f32.mrb[0].mxu0
        %605 = vdwg.mxu0
        %607 = vrot.lane.b32.xlu0 %v483, 112
        %v608 = vpop.permute.xlu0 %607
        %610 = vrot.lane.b32.xlu0 %v484, 112
        %v611 = vpop.permute.xlu0 %610
        %v613 = vsel %vm486, %v608, 0
        %v616 = vsel %vm486, %v611, 0
        %618 = vmatprep.subr.bf16.mxu0 0
        %619 = vmatpush1.bf16.xpose.msra.mxu0 %v616
        %620 = vmatprep.subr.bf16.mxu0 0
        %621 = vmatpush1.bf16.xpose.msra.mxu0 0
        %622 = vmatprep.subr.bf16.mxu0 0
        %623 = vmatpush1.bf16.xpose.msra.mxu0 0
        %624 = vmatprep.subr.bf16.mxu0 0
        %625 = vmatpush1.bf16.xpose.msra.mxu0 0
        %626 = vmatprep.subr.bf16.mxu0 0
        %627 = vmatpush1.bf16.xpose.msra.mxu0 0
        %628 = vmatprep.subr.bf16.mxu0 0
        %629 = vmatpush1.bf16.xpose.msra.mxu0 0
        %630 = vmatprep.subr.bf16.mxu0 0
        %631 = vmatpush1.bf16.xpose.msra.mxu0 0
        %632 = vmatprep.subr.bf16.mxu0 0
        %633 = vmatpush1.bf16.xpose.msra.mxu0 0
        %634 = vmatprep.subr.bf16.mxu0 0
        %635 = vmatpush1.bf16.xpose.msra.mxu0 0
        %636 = vmatprep.subr.bf16.mxu0 0
        %637 = vmatpush1.bf16.xpose.msra.mxu0 0
        %638 = vmatprep.subr.bf16.mxu0 0
        %639 = vmatpush1.bf16.xpose.msra.mxu0 0
        %640 = vmatprep.subr.bf16.mxu0 0
        %641 = vmatpush1.bf16.xpose.msra.mxu0 0
        %642 = vmatprep.subr.bf16.mxu0 0
        %643 = vmatpush1.bf16.xpose.msra.mxu0 0
        %644 = vmatprep.subr.bf16.mxu0 0
        %645 = vmatpush1.bf16.xpose.msra.mxu0 0
        %646 = vmatprep.subr.bf16.mxu0 0
        %647 = vmatpush1.bf16.xpose.msra.mxu0 0
        %648 = vmatprep.subr.bf16.mxu0 0
        %649 = vmatpush1.bf16.xpose.msra.mxu0 0
        %650 = vmatprep.mubr.bf16.mxu0 0
        %651 = vmatmul.mubr.bf16.gmra.mrb[0].mxu0 %v613
        %v652 = vpop.f32.mrb[0].mxu0
        %v653 = vadd.f32 0.0, %v652
        %v654 = vpop.f32.mrb[0].mxu0
        %v655 = vpop.f32.mrb[0].mxu0
        %v656 = vadd.f32 0.0, %v655
        %v657 = vpop.f32.mrb[0].mxu0
        %658 = vdwg.mxu0
        %v659 = vsel %vm534, %v653, -inf
        %660 = vmax.xlane.f32.xlu0 %v659
        %v661 = vpop.xlane.xlu0 %660
        %v662 = vsel %vm534, %v656, -inf
        %663 = vmax.xlane.f32.xlu0 %v662
        %v664 = vpop.xlane.xlu0 %663
        %v665 = vsub.f32 %v653, %v661
        %v666 = vsub.f32 %v656, %v664
        %v667 = vmul.f32 %v665, 1.442695
        %v668 = vpow.pop %v667
        %v669 = vmul.f32 %v666, 1.442695
        %v670 = vpow.pop %v669
        %v671 = vsel %vm534, %v668, 0.0
        %672 = vadd.xlane.f32.xlu0 %v671
        %v673 = vpop.xlane.xlu0 %672
        %v674 = vsel %vm534, %v670, 0.0
        %675 = vadd.xlane.f32.xlu0 %v674
        %v676 = vpop.xlane.xlu0 %675
        %v677 = vrcp.pop %v673
        %v678 = vrcp.pop %v676
        %v679 = vmul.f32 %v668, %v677
        %v680 = vmul.f32 %v670, %v678
        %v681 = vpack.c.bf16 %v680, %v679
        %683 = vrot.lane.b32.xlu0 %v485, 112
        %v684 = vpop.permute.xlu0 %683
        %v686 = vsel %vm534, %v681, 0
        %v689 = vsel %vm561, %v684, 0
        %691 = vmatprep.subr.bf16.mxu0 0
        %692 = vmatpush1.bf16.msra.mxu0 %v689
        %693 = vmatprep.subr.bf16.mxu0 0
        %694 = vmatpush1.bf16.msra.mxu0 0
        %695 = vmatprep.subr.bf16.mxu0 0
        %696 = vmatpush1.bf16.msra.mxu0 0
        %697 = vmatprep.subr.bf16.mxu0 0
        %698 = vmatpush1.bf16.msra.mxu0 0
        %699 = vmatprep.subr.bf16.mxu0 0
        %700 = vmatpush1.bf16.msra.mxu0 0
        %701 = vmatprep.subr.bf16.mxu0 0
        %702 = vmatpush1.bf16.msra.mxu0 0
        %703 = vmatprep.subr.bf16.mxu0 0
        %704 = vmatpush1.bf16.msra.mxu0 0
        %705 = vmatprep.subr.bf16.mxu0 0
        %706 = vmatpush1.bf16.msra.mxu0 0
        %707 = vmatprep.subr.bf16.mxu0 0
        %708 = vmatpush1.bf16.msra.mxu0 0
        %709 = vmatprep.subr.bf16.mxu0 0
        %710 = vmatpush1.bf16.msra.mxu0 0
        %711 = vmatprep.subr.bf16.mxu0 0
        %712 = vmatpush1.bf16.msra.mxu0 0
        %713 = vmatprep.subr.bf16.mxu0 0
        %714 = vmatpush1.bf16.msra.mxu0 0
        %715 = vmatprep.subr.bf16.mxu0 0
        %716 = vmatpush1.bf16.msra.mxu0 0
        %717 = vmatprep.subr.bf16.mxu0 0
        %718 = vmatpush1.bf16.msra.mxu0 0
        %719 = vmatprep.subr.bf16.mxu0 0
        %720 = vmatpush1.bf16.msra.mxu0 0
        %721 = vmatprep.subr.bf16.mxu0 0
        %722 = vmatpush1.bf16.msra.mxu0 0
        %723 = vmatprep.mubr.bf16.mxu0 0
        %724 = vmatmul.mubr.bf16.gmra.mrb[0].mxu0 %v686
        %v725 = vpop.f32.mrb[0].mxu0
        %v726 = vadd.f32 0.0, %v725
        %v727 = vpop.f32.mrb[0].mxu0
        %v728 = vpop.f32.mrb[0].mxu0
        %v729 = vadd.f32 0.0, %v728
        %v730 = vpop.f32.mrb[0].mxu0
        %731 = vdwg.mxu0
        %732 = vrot.lane.b32.xlu0 %v483, 96
        %v733 = vpop.permute.xlu0 %732
        %734 = vrot.lane.b32.xlu0 %v484, 96
        %v735 = vpop.permute.xlu0 %734
        %v737 = vsel %vm486, %v733, 0
        %v740 = vsel %vm486, %v735, 0
        %742 = vmatprep.subr.bf16.mxu0 0
        %743 = vmatpush1.bf16.xpose.msra.mxu0 %v740
        %744 = vmatprep.subr.bf16.mxu0 0
        %745 = vmatpush1.bf16.xpose.msra.mxu0 0
        %746 = vmatprep.subr.bf16.mxu0 0
        %747 = vmatpush1.bf16.xpose.msra.mxu0 0
        %748 = vmatprep.subr.bf16.mxu0 0
        %749 = vmatpush1.bf16.xpose.msra.mxu0 0
        %750 = vmatprep.subr.bf16.mxu0 0
        %751 = vmatpush1.bf16.xpose.msra.mxu0 0
        %752 = vmatprep.subr.bf16.mxu0 0
        %753 = vmatpush1.bf16.xpose.msra.mxu0 0
        %754 = vmatprep.subr.bf16.mxu0 0
        %755 = vmatpush1.bf16.xpose.msra.mxu0 0
        %756 = vmatprep.subr.bf16.mxu0 0
        %757 = vmatpush1.bf16.xpose.msra.mxu0 0
        %758 = vmatprep.subr.bf16.mxu0 0
        %759 = vmatpush1.bf16.xpose.msra.mxu0 0
        %760 = vmatprep.subr.bf16.mxu0 0
        %761 = vmatpush1.bf16.xpose.msra.mxu0 0
        %762 = vmatprep.subr.bf16.mxu0 0
        %763 = vmatpush1.bf16.xpose.msra.mxu0 0
        %764 = vmatprep.subr.bf16.mxu0 0
        %765 = vmatpush1.bf16.xpose.msra.mxu0 0
        %766 = vmatprep.subr.bf16.mxu0 0
        %767 = vmatpush1.bf16.xpose.msra.mxu0 0
        %768 = vmatprep.subr.bf16.mxu0 0
        %769 = vmatpush1.bf16.xpose.msra.mxu0 0
        %770 = vmatprep.subr.bf16.mxu0 0
        %771 = vmatpush1.bf16.xpose.msra.mxu0 0
        %772 = vmatprep.subr.bf16.mxu0 0
        %773 = vmatpush1.bf16.xpose.msra.mxu0 0
        %774 = vmatprep.mubr.bf16.mxu0 0
        %775 = vmatmul.mubr.bf16.gmra.mrb[0].mxu0 %v737
        %v776 = vpop.f32.mrb[0].mxu0
        %v777 = vadd.f32 0.0, %v776
        %v778 = vpop.f32.mrb[0].mxu0
        %v779 = vpop.f32.mrb[0].mxu0
        %v780 = vadd.f32 0.0, %v779
        %v781 = vpop.f32.mrb[0].mxu0
        %782 = vdwg.mxu0
        %v783 = vsel %vm534, %v777, -inf
        %784 = vmax.xlane.f32.xlu0 %v783
        %v785 = vpop.xlane.xlu0 %784
        %v786 = vsel %vm534, %v780, -inf
        %787 = vmax.xlane.f32.xlu0 %v786
        %v788 = vpop.xlane.xlu0 %787
        %v789 = vsub.f32 %v777, %v785
        %v790 = vsub.f32 %v780, %v788
        %v791 = vmul.f32 %v789, 1.442695
        %v792 = vpow.pop %v791
        %v793 = vmul.f32 %v790, 1.442695
        %v794 = vpow.pop %v793
        %v795 = vsel %vm534, %v792, 0.0
        %796 = vadd.xlane.f32.xlu0 %v795
        %v797 = vpop.xlane.xlu0 %796
        %v798 = vsel %vm534, %v794, 0.0
        %799 = vadd.xlane.f32.xlu0 %v798
        %v800 = vpop.xlane.xlu0 %799
        %v801 = vrcp.pop %v797
        %v802 = vrcp.pop %v800
        %v803 = vmul.f32 %v792, %v801
        %v804 = vmul.f32 %v794, %v802
        %v805 = vpack.c.bf16 %v804, %v803
        %806 = vrot.lane.b32.xlu0 %v485, 96
        %v807 = vpop.permute.xlu0 %806
        %v809 = vsel %vm534, %v805, 0
        %v812 = vsel %vm561, %v807, 0
        %814 = vmatprep.subr.bf16.mxu0 0
        %815 = vmatpush1.bf16.msra.mxu0 %v812
        %816 = vmatprep.subr.bf16.mxu0 0
        %817 = vmatpush1.bf16.msra.mxu0 0
        %818 = vmatprep.subr.bf16.mxu0 0
        %819 = vmatpush1.bf16.msra.mxu0 0
        %820 = vmatprep.subr.bf16.mxu0 0
        %821 = vmatpush1.bf16.msra.mxu0 0
        %822 = vmatprep.subr.bf16.mxu0 0
        %823 = vmatpush1.bf16.msra.mxu0 0
        %824 = vmatprep.subr.bf16.mxu0 0
        %825 = vmatpush1.bf16.msra.mxu0 0
        %826 = vmatprep.subr.bf16.mxu0 0
        %827 = vmatpush1.bf16.msra.mxu0 0
        %828 = vmatprep.subr.bf16.mxu0 0
        %829 = vmatpush1.bf16.msra.mxu0 0
        %830 = vmatprep.subr.bf16.mxu0 0
        %831 = vmatpush1.bf16.msra.mxu0 0
        %832 = vmatprep.subr.bf16.mxu0 0
        %833 = vmatpush1.bf16.msra.mxu0 0
        %834 = vmatprep.subr.bf16.mxu0 0
        %835 = vmatpush1.bf16.msra.mxu0 0
        %836 = vmatprep.subr.bf16.mxu0 0
        %837 = vmatpush1.bf16.msra.mxu0 0
        %838 = vmatprep.subr.bf16.mxu0 0
        %839 = vmatpush1.bf16.msra.mxu0 0
        %840 = vmatprep.subr.bf16.mxu0 0
        %841 = vmatpush1.bf16.msra.mxu0 0
        %842 = vmatprep.subr.bf16.mxu0 0
        %843 = vmatpush1.bf16.msra.mxu0 0
        %844 = vmatprep.subr.bf16.mxu0 0
        %845 = vmatpush1.bf16.msra.mxu0 0
        %846 = vmatprep.mubr.bf16.mxu0 0
        %847 = vmatmul.mubr.bf16.gmra.mrb[0].mxu0 %v809
        %v848 = vpop.f32.mrb[0].mxu0
        %v849 = vadd.f32 0.0, %v848
        %v850 = vpop.f32.mrb[0].mxu0
        %v851 = vpop.f32.mrb[0].mxu0
        %v852 = vadd.f32 0.0, %v851
        %v853 = vpop.f32.mrb[0].mxu0
        %854 = vdwg.mxu0
        %855 = vrot.lane.b32.xlu0 %v483, 80
        %v856 = vpop.permute.xlu0 %855
        %857 = vrot.lane.b32.xlu0 %v484, 80
        %v858 = vpop.permute.xlu0 %857
        %v860 = vsel %vm486, %v856, 0
        %v863 = vsel %vm486, %v858, 0
        %865 = vmatprep.subr.bf16.mxu0 0
        %866 = vmatpush1.bf16.xpose.msra.mxu0 %v863
        %867 = vmatprep.subr.bf16.mxu0 0
        %868 = vmatpush1.bf16.xpose.msra.mxu0 0
        %869 = vmatprep.subr.bf16.mxu0 0
        %870 = vmatpush1.bf16.xpose.msra.mxu0 0
        %871 = vmatprep.subr.bf16.mxu0 0
        %872 = vmatpush1.bf16.xpose.msra.mxu0 0
        %873 = vmatprep.subr.bf16.mxu0 0
        %874 = vmatpush1.bf16.xpose.msra.mxu0 0
        %875 = vmatprep.subr.bf16.mxu0 0
        %876 = vmatpush1.bf16.xpose.msra.mxu0 0
        %877 = vmatprep.subr.bf16.mxu0 0
        %878 = vmatpush1.bf16.xpose.msra.mxu0 0
        %879 = vmatprep.subr.bf16.mxu0 0
        %880 = vmatpush1.bf16.xpose.msra.mxu0 0
        %881 = vmatprep.subr.bf16.mxu0 0
        %882 = vmatpush1.bf16.xpose.msra.mxu0 0
        %883 = vmatprep.subr.bf16.mxu0 0
        %884 = vmatpush1.bf16.xpose.msra.mxu0 0
        %885 = vmatprep.subr.bf16.mxu0 0
        %886 = vmatpush1.bf16.xpose.msra.mxu0 0
        %887 = vmatprep.subr.bf16.mxu0 0
        %888 = vmatpush1.bf16.xpose.msra.mxu0 0
        %889 = vmatprep.subr.bf16.mxu0 0
        %890 = vmatpush1.bf16.xpose.msra.mxu0 0
        %891 = vmatprep.subr.bf16.mxu0 0
        %892 = vmatpush1.bf16.xpose.msra.mxu0 0
        %893 = vmatprep.subr.bf16.mxu0 0
        %894 = vmatpush1.bf16.xpose.msra.mxu0 0
        %895 = vmatprep.subr.bf16.mxu0 0
        %896 = vmatpush1.bf16.xpose.msra.mxu0 0
        %897 = vmatprep.mubr.bf16.mxu0 0
        %898 = vmatmul.mubr.bf16.gmra.mrb[0].mxu0 %v860
        %v899 = vpop.f32.mrb[0].mxu0
        %v900 = vadd.f32 0.0, %v899
        %v901 = vpop.f32.mrb[0].mxu0
        %v902 = vpop.f32.mrb[0].mxu0
        %v903 = vadd.f32 0.0, %v902
        %v904 = vpop.f32.mrb[0].mxu0
        %905 = vdwg.mxu0
        %v906 = vsel %vm534, %v900, -inf
        %907 = vmax.xlane.f32.xlu0 %v906
        %v908 = vpop.xlane.xlu0 %907
        %v909 = vsel %vm534, %v903, -inf
        %910 = vmax.xlane.f32.xlu0 %v909
        %v911 = vpop.xlane.xlu0 %910
        %v912 = vsub.f32 %v900, %v908
        %v913 = vsub.f32 %v903, %v911
        %v914 = vmul.f32 %v912, 1.442695
        %v915 = vpow.pop %v914
        %v916 = vmul.f32 %v913, 1.442695
        %v917 = vpow.pop %v916
        %v918 = vsel %vm534, %v915, 0.0
        %919 = vadd.xlane.f32.xlu0 %v918
        %v920 = vpop.xlane.xlu0 %919
        %v921 = vsel %vm534, %v917, 0.0
        %922 = vadd.xlane.f32.xlu0 %v921
        %v923 = vpop.xlane.xlu0 %922
        %v924 = vrcp.pop %v920
        %v925 = vrcp.pop %v923
        %v926 = vmul.f32 %v915, %v924
        %v927 = vmul.f32 %v917, %v925
        %v928 = vpack.c.bf16 %v927, %v926
        %929 = vrot.lane.b32.xlu0 %v485, 80
        %v930 = vpop.permute.xlu0 %929
        %v932 = vsel %vm534, %v928, 0
        %v935 = vsel %vm561, %v930, 0
        %937 = vmatprep.subr.bf16.mxu0 0
        %938 = vmatpush1.bf16.msra.mxu0 %v935
        %939 = vmatprep.subr.bf16.mxu0 0
        %940 = vmatpush1.bf16.msra.mxu0 0
        %941 = vmatprep.subr.bf16.mxu0 0
        %942 = vmatpush1.bf16.msra.mxu0 0
        %943 = vmatprep.subr.bf16.mxu0 0
        %944 = vmatpush1.bf16.msra.mxu0 0
        %945 = vmatprep.subr.bf16.mxu0 0
        %946 = vmatpush1.bf16.msra.mxu0 0
        %947 = vmatprep.subr.bf16.mxu0 0
        %948 = vmatpush1.bf16.msra.mxu0 0
        %949 = vmatprep.subr.bf16.mxu0 0
        %950 = vmatpush1.bf16.msra.mxu0 0
        %951 = vmatprep.subr.bf16.mxu0 0
        %952 = vmatpush1.bf16.msra.mxu0 0
        %953 = vmatprep.subr.bf16.mxu0 0
        %954 = vmatpush1.bf16.msra.mxu0 0
        %955 = vmatprep.subr.bf16.mxu0 0
        %956 = vmatpush1.bf16.msra.mxu0 0
        %957 = vmatprep.subr.bf16.mxu0 0
        %958 = vmatpush1.bf16.msra.mxu0 0
        %959 = vmatprep.subr.bf16.mxu0 0
        %960 = vmatpush1.bf16.msra.mxu0 0
        %961 = vmatprep.subr.bf16.mxu0 0
        %962 = vmatpush1.bf16.msra.mxu0 0
        %963 = vmatprep.subr.bf16.mxu0 0
        %964 = vmatpush1.bf16.msra.mxu0 0
        %965 = vmatprep.subr.bf16.mxu0 0
        %966 = vmatpush1.bf16.msra.mxu0 0
        %967 = vmatprep.subr.bf16.mxu0 0
        %968 = vmatpush1.bf16.msra.mxu0 0
        %969 = vmatprep.mubr.bf16.mxu0 0
        %970 = vmatmul.mubr.bf16.gmra.mrb[0].mxu0 %v932
        %v971 = vpop.f32.mrb[0].mxu0
        %v972 = vadd.f32 0.0, %v971
        %v973 = vpop.f32.mrb[0].mxu0
        %v974 = vpop.f32.mrb[0].mxu0
        %v975 = vadd.f32 0.0, %v974
        %v976 = vpop.f32.mrb[0].mxu0
        %977 = vdwg.mxu0
        %980 = vrot.lane.b32.xlu0 %v726, 16
        %v981 = vpop.permute.xlu0 %980
        %982 = vrot.lane.b32.xlu0 %v729, 16
        %v983 = vpop.permute.xlu0 %982
        %988 = vrot.lane.b32.xlu0 %v849, 32
        %v989 = vpop.permute.xlu0 %988
        %990 = vrot.lane.b32.xlu0 %v852, 32
        %v991 = vpop.permute.xlu0 %990
        %996 = vrot.lane.b32.xlu0 %v972, 48
        %v997 = vpop.permute.xlu0 %996
        %998 = vrot.lane.b32.xlu0 %v975, 48
        %v999 = vpop.permute.xlu0 %998
        %v1002 = vsel %vm486, %v600, %v981
        %v1003 = vsel %vm486, %v603, %v983
        %v1004 = vsel %vm341, %v1002, %v989
        %v1005 = vsel %vm341, %v1003, %v991
        %vm1006 = vcmask 392192
        %v1007 = vsel %vm1006, %v1004, %v997
        %v1008 = vsel %vm1006, %v1005, %v999
        %v1009 = vpack.c.bf16 %v1008, %v1007
        %v1010 = vld [vmem:[%s5] sm:$0xff]
        %v1011 = vld [vmem:[%s5 + $0x8] sm:$0xff]
        %v1012 = vld [vmem:[%s5 + $0x10] sm:$0xff]
        %v1013 = vld [vmem:[%s5 + $0x18] sm:$0xff]
        %v1014 = vld [vmem:[%s5 + $0x20] sm:$0xff]
        %v1015 = vld [vmem:[%s5 + $0x28] sm:$0xff]
        %v1016 = vld [vmem:[%s5 + $0x30] sm:$0xff]
        %v1017 = vld [vmem:[%s5 + $0x38] sm:$0xff]
        %v1018 = vpack.c.bf16 %v1011, %v1010
        %v1019 = vpack.c.bf16 %v1013, %v1012
        %v1020 = vpack.c.bf16 %v1015, %v1014
        %v1021 = vpack.c.bf16 %v1017, %v1016
        %v1022 = vld [vmem:[%s6] sm:$0x1]
        %v1024 = vlaneseq
        %v1025 = vshrl.u32 %v1024, 7
        %v1026 = vsub.s32 0, %v1025
        %v1027 = vrot.slane %v1022, %v1026
        %vm1029 = vcmask 523264
        %v1031 = vsel %vm1029, %v1009, 0
        %1033 = vmatprep.subr.bf16.mxu0 0
        %1034 = vmatpush1.bf16.msra.mxu0 %v1018
        %1035 = vmatprep.subr.bf16.mxu0 0
        %1036 = vmatpush1.bf16.msra.mxu0 %v1019
        %1037 = vmatprep.subr.bf16.mxu0 0
        %1038 = vmatpush1.bf16.msra.mxu0 %v1020
        %1039 = vmatprep.subr.bf16.mxu0 0
        %1040 = vmatpush1.bf16.msra.mxu0 %v1021
        %1041 = vmatprep.subr.bf16.mxu0 0
        %1042 = vmatpush1.bf16.msra.mxu0 0
        %1043 = vmatprep.subr.bf16.mxu0 0
        %1044 = vmatpush1.bf16.msra.mxu0 0
        %1045 = vmatprep.subr.bf16.mxu0 0
        %1046 = vmatpush1.bf16.msra.mxu0 0
        %1047 = vmatprep.subr.bf16.mxu0 0
        %1048 = vmatpush1.bf16.msra.mxu0 0
        %1049 = vmatprep.subr.bf16.mxu0 0
        %1050 = vmatpush1.bf16.msra.mxu0 0
        %1051 = vmatprep.subr.bf16.mxu0 0
        %1052 = vmatpush1.bf16.msra.mxu0 0
        %1053 = vmatprep.subr.bf16.mxu0 0
        %1054 = vmatpush1.bf16.msra.mxu0 0
        %1055 = vmatprep.subr.bf16.mxu0 0
        %1056 = vmatpush1.bf16.msra.mxu0 0
        %1057 = vmatprep.subr.bf16.mxu0 0
        %1058 = vmatpush1.bf16.msra.mxu0 0
        %1059 = vmatprep.subr.bf16.mxu0 0
        %1060 = vmatpush1.bf16.msra.mxu0 0
        %1061 = vmatprep.subr.bf16.mxu0 0
        %1062 = vmatpush1.bf16.msra.mxu0 0
        %1063 = vmatprep.subr.bf16.mxu0 0
        %1064 = vmatpush1.bf16.msra.mxu0 0
        %1065 = vmatprep.mubr.bf16.mxu0 0
        %1066 = vmatmul.mubr.bf16.gmra.mrb[0].mxu0 %v1031
        %v1067 = vpop.f32.mrb[0].mxu0
        %v1068 = vadd.f32 %v1027, %v1067
        %v1069 = vpop.f32.mrb[0].mxu0
        %v1070 = vpop.f32.mrb[0].mxu0
        %v1071 = vadd.f32 %v1027, %v1070
        %v1072 = vpop.f32.mrb[0].mxu0
        %1073 = vdwg.mxu0
        %1074 = vst.msk [vmem:[%s323] sm:$0xff] %vm341, %v1068
        %1075 = vst.msk [vmem:[%s323 + $0x8] sm:$0xff] %vm341, %v1071
        %s1076 = sand.u32 %s190, 1
        %s1077 = scalar_lea.sflag [#allocation4], %s1076
        %s1078 = sand.u32 %s190, 1
        %s1079 = smul.addr %s1078, 16
        %s1080 = scalar_lea.vmem [#allocation7], %s1079
        // Predicated region
        $region57: #{tpu_custom_call.1} parent=47 // pred_check
          %p1081 = pneg %p200
        $region58: #{tpu_custom_call.1} parent=47 // pred_check_branch
          %1083 = sbr.rel (%p1081) target = $region60
        $region59: #{tpu_custom_call.1} parent=47 // pred_region
          %s1085 = ssub.s32 256, 256
          %1086 = vsyncadd %s1077, %s1085
          %s1087 = smul.addr %s25, 2
          %s1088 = smul.addr %s1087, 128
          %s1089 = scalar_lea.hbm %s7, %s1088
          %s1090 = sshll.u32 %s1080, 4
          %s1091 = int_to_ptr.vmem [resolvable:$true] %s1090
          %1096 = dma.vmem_to_hbm [thread:$0]  %s1091, 256, %s1089, %s1077, 128, 128, 8
        $region60: #{tpu_custom_call.1} parent=47 // pred_fallthru
          _
      $region48: #{tpu_custom_call.1} parent=5 // pred_fallthru
        _
      %p1097 = scmp.le.s32.totalorder 2, %s20
      // Predicated region
      $region61: #{tpu_custom_call.1} parent=5 // pred_check
        %p1098 = pneg %p1097
      $region62: #{tpu_custom_call.1} parent=5 // pred_check_branch
        %1100 = sbr.rel (%p1098) target = $region64
      $region63: #{tpu_custom_call.1} parent=5 // pred_region
        %s1101 = ssub.s32 %s20, 2
        // Predicated region
        $region65: #{tpu_custom_call.1} parent=63 // pred_check
          %p1102 = pneg %p206
        $region66: #{tpu_custom_call.1} parent=63 // pred_check_branch
          %1104 = sbr.rel (%p1102) target = $region68
        $region67: #{tpu_custom_call.1} parent=63 // pred_region
          %s1105 = sand.u32 %s191, 1
          %s1106 = scalar_lea.sflag [#allocation4], %s1105
          %s1107 = sand.u32 %s191, 1
          %s1108 = smul.addr %s1107, 16
          %s1109 = scalar_lea.vmem [#allocation7], %s1108
          %1110 = dma.done %s1106, 256
        $region68: #{tpu_custom_call.1} parent=63 // pred_fallthru
          _
      $region64: #{tpu_custom_call.1} parent=5 // pred_fallthru
        _
    $region6: #{tpu_custom_call.1} parent=1 // loop_footer
      %s24 = sadd.s32 1, %s20
    $region7: #{tpu_custom_call.1} parent=1 // loop_footer_branch
      %19 = sbr.rel target = $region3
    $region8: #{tpu_custom_call.1} parent=1 // loop_exit
      _
    %1111 = vsyncpa [#allocation3], 1
    %s1112 = scalar_lea.sflag [#allocation3], 1
    %1113 = vsyncpa %s1112, 1
    %1114 = vsyncpa [#allocation6], 1
    %1115 = vsyncpa [#allocation4], 1
    %s1116 = scalar_lea.sflag [#allocation4], 1
    %1117 = vsyncpa %s1116, 1

</llo_original>
